<compile_context>
chip_gen: v7x
topology: tpu7x:2x2x1
jax: 0.10.0
libtpu: 0.0.40
codegen_flags: <defaults>
</compile_context>

<pallas_src>
import jax
import jax.numpy as jnp
from jax.experimental import pallas as pl
from jax.experimental.pallas import tpu as pltpu

_LANE = 128
_SUBLANE = 8

_SINGLE_BUFFER_WEIGHTS_OK = None  # lazily resolved: does pl.Buffered(1) lower?


def _round_up(x, m):
    return ((x + m - 1) // m) * m


def _vmem_capacity_bytes():
    """Physical VMEM of this chip; conservative 64 MiB (v7x per-TC) fallback."""
    try:
        return int(pltpu.get_tpu_info().vmem_capacity_bytes)
    except Exception:
        return 64 * 1024 * 1024


def _resident_vmem_bytes(tile_b, in_features, H, out_pad, comp_isz, out_isz,
                         weight_buffers=2):
    """Estimate of VMEM residency for one grid step (used for tile_b / limit)."""
    weights = (in_features * H + H * out_pad) * comp_isz * weight_buffers
    biases = (H + out_pad) * 4 * weight_buffers
    x_tiles = 2 * tile_b * in_features * out_isz       # double-buffered input tile
    o_tiles = 2 * tile_b * out_pad * out_isz           # double-buffered output tile
    hidden = tile_b * H * 4                            # f32 h intermediate in VMEM
    return weights + biases + x_tiles + o_tiles + hidden


def _choose_tiling(B, requested_tile_b, fits):
    """Pick (tile_b, b_pad): lane/MXU-aligned tile, batch padded only to 128."""
    b8 = _round_up(B, _SUBLANE)
    if b8 <= _LANE:
        # Tiny batch: single full-batch tile, pad only to the sublane multiple.
        return b8, b8
    b_pad = _round_up(B, _LANE)                        # <=127 wasted rows, not tile_b-1
    req = max(_LANE, (int(requested_tile_b) // _LANE) * _LANE)
    tile_b = _LANE                                     # 128 always divides b_pad
    for cand in (1024, 768, 512, 384, 256, 128):
        # ">= 2 grid steps" keeps the parallel axis splittable across v7x's 2 TCs.
        if cand <= req and b_pad % cand == 0 and b_pad // cand >= 2 and fits(cand):
            tile_b = cand
            break
    return tile_b, b_pad


def _mlp_kernel(x_ref, w1_ref, b1_ref, w2_ref, b2_ref, o_ref):
    # First linear on the MXU (operands in compute dtype, f32 accumulation).
    h = jnp.dot(x_ref[...].astype(w1_ref.dtype), w1_ref[...],
                preferred_element_type=jnp.float32)
    # Bias + ReLU in f32 on the VPU (free filler under MXU/DMA).
    h = jnp.maximum(h + b1_ref[...], 0.0)              # b1 is (1, H)
    # Second linear; hidden is downcast to the matmul operand dtype (no-op in f32).
    out = jnp.dot(h.astype(w2_ref.dtype), w2_ref[...],
                  preferred_element_type=jnp.float32)
    o_ref[...] = (out + b2_ref[...]).astype(o_ref.dtype)  # lane-dense unmasked store


def prepare_mlp_params(w1, b1, w2, b2, *, compute_dtype=jnp.bfloat16):
    """One-time cast/pad of the parameters (hoisted out of the per-call path).

    w1: [in, H], b1: [H], w2: [H, out], b2: [out].
    Output features are zero-padded to a multiple of 128 for lane-dense stores.
    """
    in_features, H = w1.shape
    out_size = w2.shape[1]
    out_pad = _round_up(out_size, _LANE)
    if out_pad != out_size:
        w2 = jnp.pad(w2, ((0, 0), (0, out_pad - out_size)))
        b2 = jnp.pad(b2, ((0, out_pad - out_size),))
    return {
        "w1": w1.astype(compute_dtype),
        "b1": b1.reshape(1, H).astype(jnp.float32),        # epilogue stays f32
        "w2": w2.astype(compute_dtype),
        "b2": b2.reshape(1, out_pad).astype(jnp.float32),
        "out_size": int(out_size),
        "compute_dtype": jnp.dtype(compute_dtype),
    }


def mlp_forward(x, params, *, tile_b=512):
    """x: [B, in] -> [B, out]; params from prepare_mlp_params()."""
    global _SINGLE_BUFFER_WEIGHTS_OK

    w1, b1, w2, b2 = params["w1"], params["b1"], params["w2"], params["b2"]
    out_size = params["out_size"]
    compute_dtype = params["compute_dtype"]

    B, in_features = x.shape
    H = w1.shape[1]
    out_pad = w2.shape[1]
    out_dtype = x.dtype

    comp_isz = jnp.dtype(compute_dtype).itemsize
    out_isz = jnp.dtype(out_dtype).itemsize

    vmem_cap = _vmem_capacity_bytes()
    vmem_budget = int(0.8 * vmem_cap)

    def fits(t):
        return _resident_vmem_bytes(t, in_features, H, out_pad,
                                    comp_isz, out_isz) <= vmem_budget

    tile_b, b_pad = _choose_tiling(B, tile_b, fits)

    # Batch padding only (at most 127 rows); padded rows are sliced off below.
    x_p = x if b_pad == B else jnp.pad(x, ((0, b_pad - B), (0, 0)))

    # Explicit scoped-VMEM limit sized from actual residency (default scoped
    # limit is only 16/32 MiB), capped at physical capacity.
    needed = _resident_vmem_bytes(tile_b, in_features, H, out_pad,
                                  comp_isz, out_isz, weight_buffers=2)
    vmem_limit = int(min(vmem_cap, max(needed * 5 // 4 + (2 << 20), 32 << 20)))

    flops = 2 * b_pad * (in_features * H + H * out_pad)
    bytes_accessed = (b_pad * in_features * out_isz
                      + (in_features * H + H * out_pad) * comp_isz
                      + (H + out_pad) * 4
                      + b_pad * out_pad * out_isz)

    def run(single_buffer_weights):
        if single_buffer_weights:
            wkw = dict(pipeline_mode=pl.Buffered(1))   # constant blocks: 1 buffer
        else:
            wkw = {}
        in_specs = [
            # x: streamed over the batch grid axis.
            pl.BlockSpec((tile_b, in_features), lambda i: (i, 0)),
            # Weights / biases: constant index_map -> VMEM-resident across steps.
            pl.BlockSpec((in_features, H), lambda i: (0, 0), **wkw),
            pl.BlockSpec((1, H), lambda i: (0, 0), **wkw),
            pl.BlockSpec((H, out_pad), lambda i: (0, 0), **wkw),
            pl.BlockSpec((1, out_pad), lambda i: (0, 0), **wkw),
        ]
        return pl.pallas_call(
            _mlp_kernel,
            out_shape=jax.ShapeDtypeStruct((b_pad, out_pad), out_dtype),
            grid=(b_pad // tile_b,),
            in_specs=in_specs,
            out_specs=pl.BlockSpec((tile_b, out_pad), lambda i: (i, 0)),
            compiler_params=pltpu.CompilerParams(
                dimension_semantics=("parallel",),
                vmem_limit_bytes=vmem_limit),
            cost_estimate=pl.CostEstimate(
                flops=flops, transcendentals=0, bytes_accessed=bytes_accessed),
        )(x_p, w1, b1, w2, b2)

    if _SINGLE_BUFFER_WEIGHTS_OK is not False:
        try:
            out_padded = run(True)
            _SINGLE_BUFFER_WEIGHTS_OK = True
        except Exception:
            # This jax version rejects pipeline_mode=Buffered(1): fall back to the
            # default double-buffered specs (correct, just ~2x weight VMEM).
            _SINGLE_BUFFER_WEIGHTS_OK = False
            out_padded = run(False)
    else:
        out_padded = run(False)

    # Strip batch / output-feature padding in plain JAX.
    return out_padded[:B, :out_size]


def init_mlp_params(key, input_size, output_size, hidden_size=256, dtype=jnp.float32):
    """torch.nn.Linear-style init: W, b ~ U(-1/sqrt(fan_in), 1/sqrt(fan_in)).
    Weights stored as [in, out] (transposed vs PyTorch)."""
    k1, k2, k3, k4 = jax.random.split(key, 4)
    bound1 = 1.0 / jnp.sqrt(jnp.array(input_size, dtype=jnp.float32))
    bound2 = 1.0 / jnp.sqrt(jnp.array(hidden_size, dtype=jnp.float32))
    w1 = jax.random.uniform(k1, (input_size, hidden_size), dtype,
                            minval=-bound1, maxval=bound1)
    b1 = jax.random.uniform(k2, (hidden_size,), dtype, minval=-bound1, maxval=bound1)
    w2 = jax.random.uniform(k3, (hidden_size, output_size), dtype,
                            minval=-bound2, maxval=bound2)
    b2 = jax.random.uniform(k4, (output_size,), dtype, minval=-bound2, maxval=bound2)
    return w1, b1, w2, b2


if __name__ == "__main__":
    key = jax.random.PRNGKey(0)
    k_x, k_p, k_x2 = jax.random.split(key, 3)

    # Small DQN-style MLP: input_size=32, output_size=4 (action-values), hidden=256.
    batch, input_size, output_size, hidden_size = 8, 32, 4, 256
    x = jax.random.normal(k_x, (batch, input_size), dtype=jnp.float32)
    w1, b1, w2, b2 = init_mlp_params(k_p, input_size, output_size, hidden_size)
    ref = jnp.maximum(x @ w1 + b1, 0.0) @ w2 + b2

    # 1) Exact f32 path (bit-for-bit-ish vs the reference).
    params_f32 = prepare_mlp_params(w1, b1, w2, b2, compute_dtype=jnp.float32)
    out_f32 = jax.block_until_ready(mlp_forward(x, params_f32))
    assert out_f32.shape == (batch, output_size)
    assert jnp.allclose(out_f32, ref, atol=1e-5, rtol=1e-5)

    # 2) Default mixed-precision path (bf16 MXU operands, f32 accumulate/epilogue).
    params_bf16 = prepare_mlp_params(w1, b1, w2, b2)
    out_bf16 = jax.block_until_ready(mlp_forward(x, params_bf16))
    assert jnp.allclose(out_bf16, ref, atol=5e-2, rtol=5e-2)

    # 3) Larger batch: exercises 128-aligned, multi-step ("parallel") batch grid
    #    with tail padding (B=200 -> b_pad=256, tile_b=128, 2 grid steps).
    B2 = 200
    x2 = jax.random.normal(k_x2, (B2, input_size), dtype=jnp.float32)
    out2 = jax.block_until_ready(mlp_forward(x2, params_f32))
    ref2 = jnp.maximum(x2 @ w1 + b1, 0.0) @ w2 + b2
    assert out2.shape == (B2, output_size)
    assert jnp.allclose(out2, ref2, atol=1e-5, rtol=1e-5)

    print("KERNEL_OK")
</pallas_src>

<mosaic_0001>
module attributes {stable_mosaic.version = 11 : i64} {
  func.func @_mlp_kernel(%arg0: i32, %arg1: memref<8x32xf32, #tpu.memory_space<vmem>>, %arg2: memref<32x256xf32, #tpu.memory_space<vmem>>, %arg3: memref<1x256xf32, #tpu.memory_space<vmem>>, %arg4: memref<256x128xf32, #tpu.memory_space<vmem>>, %arg5: memref<1x128xf32, #tpu.memory_space<vmem>>, %arg6: memref<8x128xf32, #tpu.memory_space<vmem>>) attributes {dimension_semantics = [#tpu.dimension_semantics<parallel>], iteration_bounds = array<i64: 1>, scalar_prefetch = 0 : i64, scratch_operands = 0 : i64, tpu.core_type = #tpu.core_type<tc>, window_params = [{transform_indices = @transform_0, window_bounds = array<i64: 8, 32>}, {pipeline_mode = #tpu.pipeline_mode<synchronous>, transform_indices = @transform_1, window_bounds = array<i64: 32, 256>}, {pipeline_mode = #tpu.pipeline_mode<synchronous>, transform_indices = @transform_2, window_bounds = array<i64: 1, 256>}, {pipeline_mode = #tpu.pipeline_mode<synchronous>, transform_indices = @transform_3, window_bounds = array<i64: 256, 128>}, {pipeline_mode = #tpu.pipeline_mode<synchronous>, transform_indices = @transform_4, window_bounds = array<i64: 1, 128>}, {transform_indices = @transform_5, window_bounds = array<i64: 8, 128>}]} {
    %c0 = arith.constant 0 : index
    %c0_0 = arith.constant 0 : index
    %0 = vector.load %arg1[%c0, %c0_0] : memref<8x32xf32, #tpu.memory_space<vmem>>, vector<8x32xf32>
    %c0_1 = arith.constant 0 : index
    %c0_2 = arith.constant 0 : index
    %1 = vector.load %arg2[%c0_1, %c0_2] : memref<32x256xf32, #tpu.memory_space<vmem>>, vector<32x256xf32>
    %cst = arith.constant dense<0.000000e+00> : vector<8x256xf32>
    %2 = tpu.matmul %0, %1, %cst {dimension_numbers = #tpu.dot_dimension_numbers<[1], [0], [0], [1], [0, 0, 1, 1], [], []>} : vector<8x32xf32>, vector<32x256xf32>, vector<8x256xf32> -> vector<8x256xf32>
    %c0_3 = arith.constant 0 : index
    %c0_4 = arith.constant 0 : index
    %3 = vector.load %arg3[%c0_3, %c0_4] : memref<1x256xf32, #tpu.memory_space<vmem>>, vector<1x256xf32>
    %4 = vector.broadcast %3 : vector<1x256xf32> to vector<8x256xf32>
    %5 = arith.addf %2, %4 : vector<8x256xf32>
    %cst_5 = arith.constant 0.000000e+00 : f32
    %6 = vector.broadcast %cst_5 : f32 to vector<8x256xf32>
    %7 = arith.maximumf %5, %6 : vector<8x256xf32>
    %c0_6 = arith.constant 0 : index
    %c0_7 = arith.constant 0 : index
    %8 = vector.load %arg4[%c0_6, %c0_7] : memref<256x128xf32, #tpu.memory_space<vmem>>, vector<256x128xf32>
    %cst_8 = arith.constant dense<0.000000e+00> : vector<8x128xf32>
    %9 = tpu.matmul %7, %8, %cst_8 {dimension_numbers = #tpu.dot_dimension_numbers<[1], [0], [0], [1], [0, 0, 1, 1], [], []>} : vector<8x256xf32>, vector<256x128xf32>, vector<8x128xf32> -> vector<8x128xf32>
    %c0_9 = arith.constant 0 : index
    %c0_10 = arith.constant 0 : index
    %10 = vector.load %arg5[%c0_9, %c0_10] : memref<1x128xf32, #tpu.memory_space<vmem>>, vector<1x128xf32>
    %11 = vector.broadcast %10 : vector<1x128xf32> to vector<8x128xf32>
    %12 = arith.addf %9, %11 : vector<8x128xf32>
    %c0_11 = arith.constant 0 : index
    %c0_12 = arith.constant 0 : index
    %13 = vector.load %arg6[%c0_11, %c0_12] : memref<8x128xf32, #tpu.memory_space<vmem>>, vector<8x128xf32>
    tpu.vector_store %arg6[%c0_11, %c0_12], %12 {strides = array<i32>} : memref<8x128xf32, #tpu.memory_space<vmem>>, vector<8x128xf32>,
    return
  }
  func.func @transform_0(%arg0: i32) -> (i32, i32) {
    %c0_i32 = arith.constant 0 : i32
    %c0_i32_0 = arith.constant 0 : i32
    return %arg0, %c0_i32 : i32, i32
  }
  func.func @transform_1(%arg0: i32) -> (i32, i32) {
    %c0_i32 = arith.constant 0 : i32
    %c0_i32_0 = arith.constant 0 : i32
    %c0_i32_1 = arith.constant 0 : i32
    return %c0_i32, %c0_i32_0 : i32, i32
  }
  func.func @transform_2(%arg0: i32) -> (i32, i32) {
    %c0_i32 = arith.constant 0 : i32
    %c0_i32_0 = arith.constant 0 : i32
    %c0_i32_1 = arith.constant 0 : i32
    return %c0_i32, %c0_i32_0 : i32, i32
  }
  func.func @transform_3(%arg0: i32) -> (i32, i32) {
    %c0_i32 = arith.constant 0 : i32
    %c0_i32_0 = arith.constant 0 : i32
    %c0_i32_1 = arith.constant 0 : i32
    return %c0_i32, %c0_i32_0 : i32, i32
  }
  func.func @transform_4(%arg0: i32) -> (i32, i32) {
    %c0_i32 = arith.constant 0 : i32
    %c0_i32_0 = arith.constant 0 : i32
    %c0_i32_1 = arith.constant 0 : i32
    return %c0_i32, %c0_i32_0 : i32, i32
  }
  func.func @transform_5(%arg0: i32) -> (i32, i32) {
    %c0_i32 = arith.constant 0 : i32
    %c0_i32_0 = arith.constant 0 : i32
    return %arg0, %c0_i32 : i32, i32
  }
}

module attributes {stable_mosaic.version = 11 : i64} {
  func.func @_mlp_kernel(%arg0: i32, %arg1: memref<8x32xf32, #tpu.memory_space<vmem>>, %arg2: memref<32x256xf32, #tpu.memory_space<vmem>>, %arg3: memref<1x256xf32, #tpu.memory_space<vmem>>, %arg4: memref<256x128xf32, #tpu.memory_space<vmem>>, %arg5: memref<1x128xf32, #tpu.memory_space<vmem>>, %arg6: memref<8x128xf32, #tpu.memory_space<vmem>>) attributes {dimension_semantics = [#tpu.dimension_semantics<parallel>], iteration_bounds = array<i64: 1>, scalar_prefetch = 0 : i64, scratch_operands = 0 : i64, tpu.core_type = #tpu.core_type<tc>, window_params = [{transform_indices = @transform_0, window_bounds = array<i64: 8, 32>}, {pipeline_mode = #tpu.pipeline_mode<synchronous>, transform_indices = @transform_1, window_bounds = array<i64: 32, 256>}, {pipeline_mode = #tpu.pipeline_mode<synchronous>, transform_indices = @transform_2, window_bounds = array<i64: 1, 256>}, {pipeline_mode = #tpu.pipeline_mode<synchronous>, transform_indices = @transform_3, window_bounds = array<i64: 256, 128>}, {pipeline_mode = #tpu.pipeline_mode<synchronous>, transform_indices = @transform_4, window_bounds = array<i64: 1, 128>}, {transform_indices = @transform_5, window_bounds = array<i64: 8, 128>}]} {
    %c0 = arith.constant 0 : index
    %c0_0 = arith.constant 0 : index
    %0 = vector.load %arg1[%c0, %c0_0] : memref<8x32xf32, #tpu.memory_space<vmem>>, vector<8x32xf32>
    %c0_1 = arith.constant 0 : index
    %c0_2 = arith.constant 0 : index
    %1 = vector.load %arg2[%c0_1, %c0_2] : memref<32x256xf32, #tpu.memory_space<vmem>>, vector<32x256xf32>
    %cst = arith.constant dense<0.000000e+00> : vector<8x256xf32>
    %2 = tpu.matmul %0, %1, %cst {dimension_numbers = #tpu.dot_dimension_numbers<[1], [0], [0], [1], [0, 0, 1, 1], [], []>} : vector<8x32xf32>, vector<32x256xf32>, vector<8x256xf32> -> vector<8x256xf32>
    %c0_3 = arith.constant 0 : index
    %c0_4 = arith.constant 0 : index
    %3 = vector.load %arg3[%c0_3, %c0_4] : memref<1x256xf32, #tpu.memory_space<vmem>>, vector<1x256xf32>
    %4 = vector.broadcast %3 : vector<1x256xf32> to vector<8x256xf32>
    %5 = arith.addf %2, %4 : vector<8x256xf32>
    %cst_5 = arith.constant 0.000000e+00 : f32
    %6 = vector.broadcast %cst_5 : f32 to vector<8x256xf32>
    %7 = arith.maximumf %5, %6 : vector<8x256xf32>
    %c0_6 = arith.constant 0 : index
    %c0_7 = arith.constant 0 : index
    %8 = vector.load %arg4[%c0_6, %c0_7] : memref<256x128xf32, #tpu.memory_space<vmem>>, vector<256x128xf32>
    %cst_8 = arith.constant dense<0.000000e+00> : vector<8x128xf32>
    %9 = tpu.matmul %7, %8, %cst_8 {dimension_numbers = #tpu.dot_dimension_numbers<[1], [0], [0], [1], [0, 0, 1, 1], [], []>} : vector<8x256xf32>, vector<256x128xf32>, vector<8x128xf32> -> vector<8x128xf32>
    %c0_9 = arith.constant 0 : index
    %c0_10 = arith.constant 0 : index
    %10 = vector.load %arg5[%c0_9, %c0_10] : memref<1x128xf32, #tpu.memory_space<vmem>>, vector<1x128xf32>
    %11 = vector.broadcast %10 : vector<1x128xf32> to vector<8x128xf32>
    %12 = arith.addf %9, %11 : vector<8x128xf32>
    %c0_11 = arith.constant 0 : index
    %c0_12 = arith.constant 0 : index
    %13 = vector.load %arg6[%c0_11, %c0_12] : memref<8x128xf32, #tpu.memory_space<vmem>>, vector<8x128xf32>
    tpu.vector_store %arg6[%c0_11, %c0_12], %12 {strides = array<i32>} : memref<8x128xf32, #tpu.memory_space<vmem>>, vector<8x128xf32>,
    return
  }
  func.func @transform_0(%arg0: i32) -> (i32, i32) {
    %c0_i32 = arith.constant 0 : i32
    %c0_i32_0 = arith.constant 0 : i32
    return %arg0, %c0_i32 : i32, i32
  }
  func.func @transform_1(%arg0: i32) -> (i32, i32) {
    %c0_i32 = arith.constant 0 : i32
    %c0_i32_0 = arith.constant 0 : i32
    %c0_i32_1 = arith.constant 0 : i32
    return %c0_i32, %c0_i32_0 : i32, i32
  }
  func.func @transform_2(%arg0: i32) -> (i32, i32) {
    %c0_i32 = arith.constant 0 : i32
    %c0_i32_0 = arith.constant 0 : i32
    %c0_i32_1 = arith.constant 0 : i32
    return %c0_i32, %c0_i32_0 : i32, i32
  }
  func.func @transform_3(%arg0: i32) -> (i32, i32) {
    %c0_i32 = arith.constant 0 : i32
    %c0_i32_0 = arith.constant 0 : i32
    %c0_i32_1 = arith.constant 0 : i32
    return %c0_i32, %c0_i32_0 : i32, i32
  }
  func.func @transform_4(%arg0: i32) -> (i32, i32) {
    %c0_i32 = arith.constant 0 : i32
    %c0_i32_0 = arith.constant 0 : i32
    %c0_i32_1 = arith.constant 0 : i32
    return %c0_i32, %c0_i32_0 : i32, i32
  }
  func.func @transform_5(%arg0: i32) -> (i32, i32) {
    %c0_i32 = arith.constant 0 : i32
    %c0_i32_0 = arith.constant 0 : i32
    return %arg0, %c0_i32 : i32, i32
  }
}

</mosaic_0001>

<llo_original>
// kernel: tpu_custom_call.1
$region0: #{tpu_custom_call.1}
  #allocation0 [shape = 'u32[]', space=smem, size = 0x4, offset = 0x4, fixed_abs, tag = 'smem constant byte address 0x4 - core index']
  #allocation1 [shape = 'u32[144,128]{1,0:T(1,128)}', space=vmem, size = 0x12000, scoped, tag = 'internal scratch']
  %s0 = inlined_call_operand.hbm [shape: f32[8,32], index: 0, kind: input, shape index: {}]
  %s1 = inlined_call_operand.hbm [shape: f32[32,256], index: 1, kind: input, shape index: {}]
  %s2 = inlined_call_operand.vmem [shape: f32[1,256], index: 2, kind: input, shape index: {}]
  %s3 = inlined_call_operand.hbm [shape: f32[256,128], index: 3, kind: input, shape index: {}]
  %s4 = inlined_call_operand.vmem [shape: f32[1,128], index: 4, kind: input, shape index: {}]
  %s5 = inlined_call_operand.hbm [shape: f32[8,128], index: 5, kind: output, shape index: {}]
  %s6 = sld [smem:[#allocation0]]
  $region42: #{tpu_custom_call.1} parent=0
    _
  %s8 = ssub.s32 1, %s6
  %s9 = scalar_select 0, %s8, %s6
  $region1: #{tpu_custom_call.1} parent=0
    #allocation2 [shape = 'u8[4096]{0}', space=vmem, size = 0x1000, scoped, tag = 'input window, operand 0, single buffered']
    #allocation3 [shape = 's32[1]{0}', space=sflag, size = 0x4, scoped, tag = 'scoped memory for tpu_custom_call.1']
    #allocation4 [shape = 's32[1]{0}', space=sflag, size = 0x4, scoped, tag = 'scoped memory for tpu_custom_call.1']
    #allocation5 [shape = 'u8[32768]{0}', space=vmem, size = 0x8000, scoped, tag = 'input window, operand 1, single buffered']
    #allocation6 [shape = 's32[1]{0}', space=sflag, size = 0x4, scoped, tag = 'scoped memory for tpu_custom_call.1']
    #allocation7 [shape = 'u8[131072]{0}', space=vmem, size = 0x20000, scoped, tag = 'input window, operand 3, single buffered']
    #allocation8 [shape = 'u8[4096]{0}', space=vmem, size = 0x1000, scoped, tag = 'output window, operand 0, single buffered']
    %10 = vsyncpa [#allocation3], 0
    %11 = vsyncpa [#allocation6], 0
    %12 = vsyncpa [#allocation4], 0
    // Predicated region
    $region2: #{tpu_custom_call.1} parent=1 // pred_check
      _
    $region3: #{tpu_custom_call.1} parent=1 // pred_check_branch
      %14 = sbr.rel (0) target = $region5
    $region4: #{tpu_custom_call.1} parent=1 // pred_region
      %s16 = ssub.s32 128, 128
      %17 = vsyncadd [#allocation3], %s16
      %s19 = sshll.u32 [#allocation2], 4
      %s20 = int_to_ptr.vmem [resolvable:$true] %s19
      %22 = dma.hbm_to_vmem [thread:$0]  %s0, 128, %s20, [#allocation3]
    $region5: #{tpu_custom_call.1} parent=1 // pred_fallthru
      _
    // Predicated region
    $region6: #{tpu_custom_call.1} parent=1 // pred_check
      _
    $region7: #{tpu_custom_call.1} parent=1 // pred_check_branch
      %24 = sbr.rel (0) target = $region9
    $region8: #{tpu_custom_call.1} parent=1 // pred_region
      %s26 = ssub.s32 1024, 1024
      %27 = vsyncadd [#allocation6], %s26
      %s28 = sshll.u32 [#allocation5], 4
      %s29 = int_to_ptr.vmem [resolvable:$true] %s28
      %34 = dma.hbm_to_vmem [thread:$0]  %s1, 1024, %s29, [#allocation6], 256, 256, 16
    $region9: #{tpu_custom_call.1} parent=1 // pred_fallthru
      _
    // Predicated region
    $region10: #{tpu_custom_call.1} parent=1 // pred_check
      _
    $region11: #{tpu_custom_call.1} parent=1 // pred_check_branch
      %36 = sbr.rel (0) target = $region13
    $region12: #{tpu_custom_call.1} parent=1 // pred_region
      _
    $region13: #{tpu_custom_call.1} parent=1 // pred_fallthru
      _
    // Predicated region
    $region14: #{tpu_custom_call.1} parent=1 // pred_check
      _
    $region15: #{tpu_custom_call.1} parent=1 // pred_check_branch
      %38 = sbr.rel (0) target = $region17
    $region16: #{tpu_custom_call.1} parent=1 // pred_region
      %s40 = ssub.s32 4096, 4096
      %41 = vsyncadd [#allocation6], %s40
      %s42 = sshll.u32 [#allocation7], 4
      %s43 = int_to_ptr.vmem [resolvable:$true] %s42
      %48 = dma.hbm_to_vmem [thread:$0]  %s3, 4096, %s43, [#allocation6], 128, 128, 8
    $region17: #{tpu_custom_call.1} parent=1 // pred_fallthru
      _
    // Predicated region
    $region18: #{tpu_custom_call.1} parent=1 // pred_check
      _
    $region19: #{tpu_custom_call.1} parent=1 // pred_check_branch
      %50 = sbr.rel (0) target = $region21
    $region20: #{tpu_custom_call.1} parent=1 // pred_region
      _
    $region21: #{tpu_custom_call.1} parent=1 // pred_fallthru
      _
    // Predicated region
    $region22: #{tpu_custom_call.1} parent=1 // pred_check
      _
    $region23: #{tpu_custom_call.1} parent=1 // pred_check_branch
      %52 = sbr.rel (0) target = $region25
    $region24: #{tpu_custom_call.1} parent=1 // pred_region
      %53 = dma.done [#allocation3], 128
    $region25: #{tpu_custom_call.1} parent=1 // pred_fallthru
      _
    // Predicated region
    $region26: #{tpu_custom_call.1} parent=1 // pred_check
      _
    $region27: #{tpu_custom_call.1} parent=1 // pred_check_branch
      %55 = sbr.rel (0) target = $region29
    $region28: #{tpu_custom_call.1} parent=1 // pred_region
      %56 = dma.done [#allocation6], 1024
    $region29: #{tpu_custom_call.1} parent=1 // pred_fallthru
      _
    // Predicated region
    $region30: #{tpu_custom_call.1} parent=1 // pred_check
      _
    $region31: #{tpu_custom_call.1} parent=1 // pred_check_branch
      %58 = sbr.rel (0) target = $region33
    $region32: #{tpu_custom_call.1} parent=1 // pred_region
      %59 = dma.done [#allocation6], 4096
    $region33: #{tpu_custom_call.1} parent=1 // pred_fallthru
      _
    %v60 = vld [vmem:[#allocation2] sm:$0xff]
    %v61 = vld [vmem:[#allocation5] sm:$0xff]
    %v62 = vld [vmem:[#allocation5 + $0x8] sm:$0xff]
    %v63 = vld [vmem:[#allocation5 + $0x10] sm:$0xff]
    %v64 = vld [vmem:[#allocation5 + $0x18] sm:$0xff]
    %v65 = vld [vmem:[#allocation5 + $0x20] sm:$0xff]
    %v66 = vld [vmem:[#allocation5 + $0x28] sm:$0xff]
    %v67 = vld [vmem:[#allocation5 + $0x30] sm:$0xff]
    %v68 = vld [vmem:[#allocation5 + $0x38] sm:$0xff]
    %v69 = vld [vmem:[%s2] sm:$0x3]
    %v71 = vlaneseq
    %v72 = vshrl.u32 %v71, 7
    %v73 = vsub.s32 0, %v72
    %v74 = vrot.slane %v69, %v73
    %v75 = vlaneseq
    %v76 = vshrl.u32 %v75, 7
    %v77 = vsub.s32 1, %v76
    %v78 = vrot.slane %v69, %v77
    %vm81 = vcmask 261120
    %v83 = vsel %vm81, %v60, 0
    %85 = vmatprep.subr.mxu0 %v62
    %86 = vmatpush1.msra.mxu0 %v61
    %87 = vmatprep.subr.mxu0 %v64
    %88 = vmatpush1.msra.mxu0 %v63
    %89 = vmatprep.subr.mxu0 %v66
    %90 = vmatpush1.msra.mxu0 %v65
    %91 = vmatprep.subr.mxu0 %v68
    %92 = vmatpush1.msra.mxu0 %v67
    %93 = vmatprep.subr.mxu0 0.0
    %94 = vmatpush1.msra.mxu0 0.0
    %95 = vmatprep.subr.mxu0 0.0
    %96 = vmatpush1.msra.mxu0 0.0
    %97 = vmatprep.subr.mxu0 0.0
    %98 = vmatpush1.msra.mxu0 0.0
    %99 = vmatprep.subr.mxu0 0.0
    %100 = vmatpush1.msra.mxu0 0.0
    %101 = vmatprep.subr.mxu0 0.0
    %102 = vmatpush1.msra.mxu0 0.0
    %103 = vmatprep.subr.mxu0 0.0
    %104 = vmatpush1.msra.mxu0 0.0
    %105 = vmatprep.subr.mxu0 0.0
    %106 = vmatpush1.msra.mxu0 0.0
    %107 = vmatprep.subr.mxu0 0.0
    %108 = vmatpush1.msra.mxu0 0.0
    %109 = vmatprep.subr.mxu0 0.0
    %110 = vmatpush1.msra.mxu0 0.0
    %111 = vmatprep.subr.mxu0 0.0
    %112 = vmatpush1.msra.mxu0 0.0
    %113 = vmatprep.subr.mxu0 0.0
    %114 = vmatpush1.msra.mxu0 0.0
    %115 = vmatprep.subr.mxu0 0.0
    %116 = vmatpush1.msra.mxu0 0.0
    %117 = vmatprep.subr.mxu0 0.0
    %118 = vmatpush1.msra.mxu0 0.0
    %119 = vmatprep.subr.mxu0 0.0
    %120 = vmatpush1.msra.mxu0 0.0
    %121 = vmatprep.subr.mxu0 0.0
    %122 = vmatpush1.msra.mxu0 0.0
    %123 = vmatprep.subr.mxu0 0.0
    %124 = vmatpush1.msra.mxu0 0.0
    %125 = vmatprep.subr.mxu0 0.0
    %126 = vmatpush1.msra.mxu0 0.0
    %127 = vmatprep.subr.mxu0 0.0
    %128 = vmatpush1.msra.mxu0 0.0
    %129 = vmatprep.subr.mxu0 0.0
    %130 = vmatpush1.msra.mxu0 0.0
    %131 = vmatprep.subr.mxu0 0.0
    %132 = vmatpush1.msra.mxu0 0.0
    %133 = vmatprep.subr.mxu0 0.0
    %134 = vmatpush1.msra.mxu0 0.0
    %135 = vmatprep.subr.mxu0 0.0
    %136 = vmatpush1.msra.mxu0 0.0
    %137 = vmatprep.subr.mxu0 0.0
    %138 = vmatpush1.msra.mxu0 0.0
    %139 = vmatprep.subr.mxu0 0.0
    %140 = vmatpush1.msra.mxu0 0.0
    %141 = vmatprep.subr.mxu0 0.0
    %142 = vmatpush1.msra.mxu0 0.0
    %143 = vmatprep.subr.mxu0 0.0
    %144 = vmatpush1.msra.mxu0 0.0
    %145 = vmatprep.subr.mxu0 0.0
    %146 = vmatpush1.msra.mxu0 0.0
    %147 = vmatprep.subr.mxu0 0.0
    %148 = vmatpush1.msra.mxu0 0.0
    %149 = vmatprep.mubr.f32.mxu0 0.0
    %150 = vmatmul.mubr.f32.gmra.mrb[0].mxu0 %v83
    %v151 = vpop.f32.mrb[0].mxu0
    %v152 = vadd.f32 %v74, %v151
    %v153 = vpop.f32.mrb[0].mxu0
    %v154 = vadd.f32 %v78, %v153
    %155 = vdwg.mxu0
    %v156 = vmax.f32 %v152, 0.0
    %v157 = vmax.f32 %v154, 0.0
    %v158 = vld [vmem:[#allocation7] sm:$0xff]
    %v159 = vld [vmem:[#allocation7 + $0x8] sm:$0xff]
    %v160 = vld [vmem:[#allocation7 + $0x10] sm:$0xff]
    %v161 = vld [vmem:[#allocation7 + $0x18] sm:$0xff]
    %v162 = vld [vmem:[#allocation7 + $0x20] sm:$0xff]
    %v163 = vld [vmem:[#allocation7 + $0x28] sm:$0xff]
    %v164 = vld [vmem:[#allocation7 + $0x30] sm:$0xff]
    %v165 = vld [vmem:[#allocation7 + $0x38] sm:$0xff]
    %v166 = vld [vmem:[#allocation7 + $0x40] sm:$0xff]
    %v167 = vld [vmem:[#allocation7 + $0x48] sm:$0xff]
    %v168 = vld [vmem:[#allocation7 + $0x50] sm:$0xff]
    %v169 = vld [vmem:[#allocation7 + $0x58] sm:$0xff]
    %v170 = vld [vmem:[#allocation7 + $0x60] sm:$0xff]
    %v171 = vld [vmem:[#allocation7 + $0x68] sm:$0xff]
    %v172 = vld [vmem:[#allocation7 + $0x70] sm:$0xff]
    %v173 = vld [vmem:[#allocation7 + $0x78] sm:$0xff]
    %v174 = vld [vmem:[#allocation7 + $0x80] sm:$0xff]
    %v175 = vld [vmem:[#allocation7 + $0x88] sm:$0xff]
    %v176 = vld [vmem:[#allocation7 + $0x90] sm:$0xff]
    %v177 = vld [vmem:[#allocation7 + $0x98] sm:$0xff]
    %v178 = vld [vmem:[#allocation7 + $0xa0] sm:$0xff]
    %v179 = vld [vmem:[#allocation7 + $0xa8] sm:$0xff]
    %v180 = vld [vmem:[#allocation7 + $0xb0] sm:$0xff]
    %v181 = vld [vmem:[#allocation7 + $0xb8] sm:$0xff]
    %v182 = vld [vmem:[#allocation7 + $0xc0] sm:$0xff]
    %v183 = vld [vmem:[#allocation7 + $0xc8] sm:$0xff]
    %v184 = vld [vmem:[#allocation7 + $0xd0] sm:$0xff]
    %v185 = vld [vmem:[#allocation7 + $0xd8] sm:$0xff]
    %v186 = vld [vmem:[#allocation7 + $0xe0] sm:$0xff]
    %v187 = vld [vmem:[#allocation7 + $0xe8] sm:$0xff]
    %v188 = vld [vmem:[#allocation7 + $0xf0] sm:$0xff]
    %v189 = vld [vmem:[#allocation7 + $0xf8] sm:$0xff]
    %v190 = vld [vmem:[%s4] sm:$0x1]
    %v192 = vlaneseq
    %v193 = vshrl.u32 %v192, 7
    %v194 = vsub.s32 0, %v193
    %v195 = vrot.slane %v190, %v194
    %197 = vmatprep.subr.mxu0 0.0
    %198 = vmatpush1.msra.mxu0 %v158
    %199 = vmatprep.subr.mxu0 0.0
    %200 = vmatpush1.msra.mxu0 %v159
    %201 = vmatprep.subr.mxu0 0.0
    %202 = vmatpush1.msra.mxu0 %v160
    %203 = vmatprep.subr.mxu0 0.0
    %204 = vmatpush1.msra.mxu0 %v161
    %205 = vmatprep.subr.mxu0 0.0
    %206 = vmatpush1.msra.mxu0 %v162
    %207 = vmatprep.subr.mxu0 0.0
    %208 = vmatpush1.msra.mxu0 %v163
    %209 = vmatprep.subr.mxu0 0.0
    %210 = vmatpush1.msra.mxu0 %v164
    %211 = vmatprep.subr.mxu0 0.0
    %212 = vmatpush1.msra.mxu0 %v165
    %213 = vmatprep.subr.mxu0 0.0
    %214 = vmatpush1.msra.mxu0 %v166
    %215 = vmatprep.subr.mxu0 0.0
    %216 = vmatpush1.msra.mxu0 %v167
    %217 = vmatprep.subr.mxu0 0.0
    %218 = vmatpush1.msra.mxu0 %v168
    %219 = vmatprep.subr.mxu0 0.0
    %220 = vmatpush1.msra.mxu0 %v169
    %221 = vmatprep.subr.mxu0 0.0
    %222 = vmatpush1.msra.mxu0 %v170
    %223 = vmatprep.subr.mxu0 0.0
    %224 = vmatpush1.msra.mxu0 %v171
    %225 = vmatprep.subr.mxu0 0.0
    %226 = vmatpush1.msra.mxu0 %v172
    %227 = vmatprep.subr.mxu0 0.0
    %228 = vmatpush1.msra.mxu0 %v173
    %229 = vmatprep.subr.mxu0 0.0
    %230 = vmatpush1.msra.mxu0 %v174
    %231 = vmatprep.subr.mxu0 0.0
    %232 = vmatpush1.msra.mxu0 %v175
    %233 = vmatprep.subr.mxu0 0.0
    %234 = vmatpush1.msra.mxu0 %v176
    %235 = vmatprep.subr.mxu0 0.0
    %236 = vmatpush1.msra.mxu0 %v177
    %237 = vmatprep.subr.mxu0 0.0
    %238 = vmatpush1.msra.mxu0 %v178
    %239 = vmatprep.subr.mxu0 0.0
    %240 = vmatpush1.msra.mxu0 %v179
    %241 = vmatprep.subr.mxu0 0.0
    %242 = vmatpush1.msra.mxu0 %v180
    %243 = vmatprep.subr.mxu0 0.0
    %244 = vmatpush1.msra.mxu0 %v181
    %245 = vmatprep.subr.mxu0 0.0
    %246 = vmatpush1.msra.mxu0 %v182
    %247 = vmatprep.subr.mxu0 0.0
    %248 = vmatpush1.msra.mxu0 %v183
    %249 = vmatprep.subr.mxu0 0.0
    %250 = vmatpush1.msra.mxu0 %v184
    %251 = vmatprep.subr.mxu0 0.0
    %252 = vmatpush1.msra.mxu0 %v185
    %253 = vmatprep.subr.mxu0 0.0
    %254 = vmatpush1.msra.mxu0 %v186
    %255 = vmatprep.subr.mxu0 0.0
    %256 = vmatpush1.msra.mxu0 %v187
    %257 = vmatprep.subr.mxu0 0.0
    %258 = vmatpush1.msra.mxu0 %v188
    %259 = vmatprep.subr.mxu0 0.0
    %260 = vmatpush1.msra.mxu0 %v189
    %261 = vmatprep.mubr.f32.mxu0 %v157
    %262 = vmatmul.mubr.f32.gmra.mrb[0].mxu0 %v156
    %v263 = vpop.f32.mrb[0].mxu0
    %v264 = vadd.f32 %v195, %v263
    %v265 = vpop.f32.mrb[0].mxu0
    %266 = vdwg.mxu0
    %267 = vst [vmem:[#allocation8] sm:$0xff] %v264
    // Predicated region
    $region34: #{tpu_custom_call.1} parent=1 // pred_check
      _
    $region35: #{tpu_custom_call.1} parent=1 // pred_check_branch
      %269 = sbr.rel (0) target = $region37
    $region36: #{tpu_custom_call.1} parent=1 // pred_region
      %s271 = ssub.s32 128, 128
      %272 = vsyncadd [#allocation4], %s271
      %s274 = sshll.u32 [#allocation8], 4
      %s275 = int_to_ptr.vmem [resolvable:$true] %s274
      %277 = dma.vmem_to_hbm [thread:$0]  %s275, 128, %s5, [#allocation4]
    $region37: #{tpu_custom_call.1} parent=1 // pred_fallthru
      _
    // Predicated region
    $region38: #{tpu_custom_call.1} parent=1 // pred_check
      _
    $region39: #{tpu_custom_call.1} parent=1 // pred_check_branch
      %279 = sbr.rel (0) target = $region41
    $region40: #{tpu_custom_call.1} parent=1 // pred_region
      %280 = dma.done [#allocation4], 128
    $region41: #{tpu_custom_call.1} parent=1 // pred_fallthru
      _
    %281 = vsyncpa [#allocation3], 1
    %282 = vsyncpa [#allocation6], 1
    %283 = vsyncpa [#allocation4], 1

// kernel: tpu_custom_call.1
$region0: #{tpu_custom_call.1}
  #allocation0 [shape = 'u32[]', space=smem, size = 0x4, offset = 0x4, fixed_abs, tag = 'smem constant byte address 0x4 - core index']
  #allocation1 [shape = 'u32[144,128]{1,0:T(1,128)}', space=vmem, size = 0x12000, scoped, tag = 'internal scratch']
  %s0 = inlined_call_operand.hbm [shape: f32[8,32], index: 0, kind: input, shape index: {}]
  %s1 = inlined_call_operand.hbm [shape: f32[32,256], index: 1, kind: input, shape index: {}]
  %s2 = inlined_call_operand.vmem [shape: f32[1,256], index: 2, kind: input, shape index: {}]
  %s3 = inlined_call_operand.hbm [shape: f32[256,128], index: 3, kind: input, shape index: {}]
  %s4 = inlined_call_operand.vmem [shape: f32[1,128], index: 4, kind: input, shape index: {}]
  %s5 = inlined_call_operand.hbm [shape: f32[8,128], index: 5, kind: output, shape index: {}]
  %s6 = sld [smem:[#allocation0]]
  $region42: #{tpu_custom_call.1} parent=0
    _
  %s8 = ssub.s32 1, %s6
  %s9 = scalar_select 0, %s8, %s6
  $region1: #{tpu_custom_call.1} parent=0
    #allocation2 [shape = 'u8[4096]{0}', space=vmem, size = 0x1000, scoped, tag = 'input window, operand 0, single buffered']
    #allocation3 [shape = 's32[1]{0}', space=sflag, size = 0x4, scoped, tag = 'scoped memory for tpu_custom_call.1']
    #allocation4 [shape = 's32[1]{0}', space=sflag, size = 0x4, scoped, tag = 'scoped memory for tpu_custom_call.1']
    #allocation5 [shape = 'u8[32768]{0}', space=vmem, size = 0x8000, scoped, tag = 'input window, operand 1, single buffered']
    #allocation6 [shape = 's32[1]{0}', space=sflag, size = 0x4, scoped, tag = 'scoped memory for tpu_custom_call.1']
    #allocation7 [shape = 'u8[131072]{0}', space=vmem, size = 0x20000, scoped, tag = 'input window, operand 3, single buffered']
    #allocation8 [shape = 'u8[4096]{0}', space=vmem, size = 0x1000, scoped, tag = 'output window, operand 0, single buffered']
    %10 = vsyncpa [#allocation3], 0
    %11 = vsyncpa [#allocation6], 0
    %12 = vsyncpa [#allocation4], 0
    // Predicated region
    $region2: #{tpu_custom_call.1} parent=1 // pred_check
      _
    $region3: #{tpu_custom_call.1} parent=1 // pred_check_branch
      %14 = sbr.rel (0) target = $region5
    $region4: #{tpu_custom_call.1} parent=1 // pred_region
      %s16 = ssub.s32 128, 128
      %17 = vsyncadd [#allocation3], %s16
      %s19 = sshll.u32 [#allocation2], 4
      %s20 = int_to_ptr.vmem [resolvable:$true] %s19
      %22 = dma.hbm_to_vmem [thread:$0]  %s0, 128, %s20, [#allocation3]
    $region5: #{tpu_custom_call.1} parent=1 // pred_fallthru
      _
    // Predicated region
    $region6: #{tpu_custom_call.1} parent=1 // pred_check
      _
    $region7: #{tpu_custom_call.1} parent=1 // pred_check_branch
      %24 = sbr.rel (0) target = $region9
    $region8: #{tpu_custom_call.1} parent=1 // pred_region
      %s26 = ssub.s32 1024, 1024
      %27 = vsyncadd [#allocation6], %s26
      %s28 = sshll.u32 [#allocation5], 4
      %s29 = int_to_ptr.vmem [resolvable:$true] %s28
      %34 = dma.hbm_to_vmem [thread:$0]  %s1, 1024, %s29, [#allocation6], 256, 256, 16
    $region9: #{tpu_custom_call.1} parent=1 // pred_fallthru
      _
    // Predicated region
    $region10: #{tpu_custom_call.1} parent=1 // pred_check
      _
    $region11: #{tpu_custom_call.1} parent=1 // pred_check_branch
      %36 = sbr.rel (0) target = $region13
    $region12: #{tpu_custom_call.1} parent=1 // pred_region
      _
    $region13: #{tpu_custom_call.1} parent=1 // pred_fallthru
      _
    // Predicated region
    $region14: #{tpu_custom_call.1} parent=1 // pred_check
      _
    $region15: #{tpu_custom_call.1} parent=1 // pred_check_branch
      %38 = sbr.rel (0) target = $region17
    $region16: #{tpu_custom_call.1} parent=1 // pred_region
      %s40 = ssub.s32 4096, 4096
      %41 = vsyncadd [#allocation6], %s40
      %s42 = sshll.u32 [#allocation7], 4
      %s43 = int_to_ptr.vmem [resolvable:$true] %s42
      %48 = dma.hbm_to_vmem [thread:$0]  %s3, 4096, %s43, [#allocation6], 128, 128, 8
    $region17: #{tpu_custom_call.1} parent=1 // pred_fallthru
      _
    // Predicated region
    $region18: #{tpu_custom_call.1} parent=1 // pred_check
      _
    $region19: #{tpu_custom_call.1} parent=1 // pred_check_branch
      %50 = sbr.rel (0) target = $region21
    $region20: #{tpu_custom_call.1} parent=1 // pred_region
      _
    $region21: #{tpu_custom_call.1} parent=1 // pred_fallthru
      _
    // Predicated region
    $region22: #{tpu_custom_call.1} parent=1 // pred_check
      _
    $region23: #{tpu_custom_call.1} parent=1 // pred_check_branch
      %52 = sbr.rel (0) target = $region25
    $region24: #{tpu_custom_call.1} parent=1 // pred_region
      %53 = dma.done [#allocation3], 128
    $region25: #{tpu_custom_call.1} parent=1 // pred_fallthru
      _
    // Predicated region
    $region26: #{tpu_custom_call.1} parent=1 // pred_check
      _
    $region27: #{tpu_custom_call.1} parent=1 // pred_check_branch
      %55 = sbr.rel (0) target = $region29
    $region28: #{tpu_custom_call.1} parent=1 // pred_region
      %56 = dma.done [#allocation6], 1024
    $region29: #{tpu_custom_call.1} parent=1 // pred_fallthru
      _
    // Predicated region
    $region30: #{tpu_custom_call.1} parent=1 // pred_check
      _
    $region31: #{tpu_custom_call.1} parent=1 // pred_check_branch
      %58 = sbr.rel (0) target = $region33
    $region32: #{tpu_custom_call.1} parent=1 // pred_region
      %59 = dma.done [#allocation6], 4096
    $region33: #{tpu_custom_call.1} parent=1 // pred_fallthru
      _
    %v60 = vld [vmem:[#allocation2] sm:$0xff]
    %v61 = vld [vmem:[#allocation5] sm:$0xff]
    %v62 = vld [vmem:[#allocation5 + $0x8] sm:$0xff]
    %v63 = vld [vmem:[#allocation5 + $0x10] sm:$0xff]
    %v64 = vld [vmem:[#allocation5 + $0x18] sm:$0xff]
    %v65 = vld [vmem:[#allocation5 + $0x20] sm:$0xff]
    %v66 = vld [vmem:[#allocation5 + $0x28] sm:$0xff]
    %v67 = vld [vmem:[#allocation5 + $0x30] sm:$0xff]
    %v68 = vld [vmem:[#allocation5 + $0x38] sm:$0xff]
    %v69 = vld [vmem:[%s2] sm:$0x3]
    %v71 = vlaneseq
    %v72 = vshrl.u32 %v71, 7
    %v73 = vsub.s32 0, %v72
    %v74 = vrot.slane %v69, %v73
    %v75 = vlaneseq
    %v76 = vshrl.u32 %v75, 7
    %v77 = vsub.s32 1, %v76
    %v78 = vrot.slane %v69, %v77
    %vm81 = vcmask 261120
    %v83 = vsel %vm81, %v60, 0
    %85 = vmatprep.subr.mxu0 %v62
    %86 = vmatpush1.msra.mxu0 %v61
    %87 = vmatprep.subr.mxu0 %v64
    %88 = vmatpush1.msra.mxu0 %v63
    %89 = vmatprep.subr.mxu0 %v66
    %90 = vmatpush1.msra.mxu0 %v65
    %91 = vmatprep.subr.mxu0 %v68
    %92 = vmatpush1.msra.mxu0 %v67
    %93 = vmatprep.subr.mxu0 0.0
    %94 = vmatpush1.msra.mxu0 0.0
    %95 = vmatprep.subr.mxu0 0.0
    %96 = vmatpush1.msra.mxu0 0.0
    %97 = vmatprep.subr.mxu0 0.0
    %98 = vmatpush1.msra.mxu0 0.0
    %99 = vmatprep.subr.mxu0 0.0
    %100 = vmatpush1.msra.mxu0 0.0
    %101 = vmatprep.subr.mxu0 0.0
    %102 = vmatpush1.msra.mxu0 0.0
    %103 = vmatprep.subr.mxu0 0.0
    %104 = vmatpush1.msra.mxu0 0.0
    %105 = vmatprep.subr.mxu0 0.0
    %106 = vmatpush1.msra.mxu0 0.0
    %107 = vmatprep.subr.mxu0 0.0
    %108 = vmatpush1.msra.mxu0 0.0
    %109 = vmatprep.subr.mxu0 0.0
    %110 = vmatpush1.msra.mxu0 0.0
    %111 = vmatprep.subr.mxu0 0.0
    %112 = vmatpush1.msra.mxu0 0.0
    %113 = vmatprep.subr.mxu0 0.0
    %114 = vmatpush1.msra.mxu0 0.0
    %115 = vmatprep.subr.mxu0 0.0
    %116 = vmatpush1.msra.mxu0 0.0
    %117 = vmatprep.subr.mxu0 0.0
    %118 = vmatpush1.msra.mxu0 0.0
    %119 = vmatprep.subr.mxu0 0.0
    %120 = vmatpush1.msra.mxu0 0.0
    %121 = vmatprep.subr.mxu0 0.0
    %122 = vmatpush1.msra.mxu0 0.0
    %123 = vmatprep.subr.mxu0 0.0
    %124 = vmatpush1.msra.mxu0 0.0
    %125 = vmatprep.subr.mxu0 0.0
    %126 = vmatpush1.msra.mxu0 0.0
    %127 = vmatprep.subr.mxu0 0.0
    %128 = vmatpush1.msra.mxu0 0.0
    %129 = vmatprep.subr.mxu0 0.0
    %130 = vmatpush1.msra.mxu0 0.0
    %131 = vmatprep.subr.mxu0 0.0
    %132 = vmatpush1.msra.mxu0 0.0
    %133 = vmatprep.subr.mxu0 0.0
    %134 = vmatpush1.msra.mxu0 0.0
    %135 = vmatprep.subr.mxu0 0.0
    %136 = vmatpush1.msra.mxu0 0.0
    %137 = vmatprep.subr.mxu0 0.0
    %138 = vmatpush1.msra.mxu0 0.0
    %139 = vmatprep.subr.mxu0 0.0
    %140 = vmatpush1.msra.mxu0 0.0
    %141 = vmatprep.subr.mxu0 0.0
    %142 = vmatpush1.msra.mxu0 0.0
    %143 = vmatprep.subr.mxu0 0.0
    %144 = vmatpush1.msra.mxu0 0.0
    %145 = vmatprep.subr.mxu0 0.0
    %146 = vmatpush1.msra.mxu0 0.0
    %147 = vmatprep.subr.mxu0 0.0
    %148 = vmatpush1.msra.mxu0 0.0
    %149 = vmatprep.mubr.f32.mxu0 0.0
    %150 = vmatmul.mubr.f32.gmra.mrb[0].mxu0 %v83
    %v151 = vpop.f32.mrb[0].mxu0
    %v152 = vadd.f32 %v74, %v151
    %v153 = vpop.f32.mrb[0].mxu0
    %v154 = vadd.f32 %v78, %v153
    %155 = vdwg.mxu0
    %v156 = vmax.f32 %v152, 0.0
    %v157 = vmax.f32 %v154, 0.0
    %v158 = vld [vmem:[#allocation7] sm:$0xff]
    %v159 = vld [vmem:[#allocation7 + $0x8] sm:$0xff]
    %v160 = vld [vmem:[#allocation7 + $0x10] sm:$0xff]
    %v161 = vld [vmem:[#allocation7 + $0x18] sm:$0xff]
    %v162 = vld [vmem:[#allocation7 + $0x20] sm:$0xff]
    %v163 = vld [vmem:[#allocation7 + $0x28] sm:$0xff]
    %v164 = vld [vmem:[#allocation7 + $0x30] sm:$0xff]
    %v165 = vld [vmem:[#allocation7 + $0x38] sm:$0xff]
    %v166 = vld [vmem:[#allocation7 + $0x40] sm:$0xff]
    %v167 = vld [vmem:[#allocation7 + $0x48] sm:$0xff]
    %v168 = vld [vmem:[#allocation7 + $0x50] sm:$0xff]
    %v169 = vld [vmem:[#allocation7 + $0x58] sm:$0xff]
    %v170 = vld [vmem:[#allocation7 + $0x60] sm:$0xff]
    %v171 = vld [vmem:[#allocation7 + $0x68] sm:$0xff]
    %v172 = vld [vmem:[#allocation7 + $0x70] sm:$0xff]
    %v173 = vld [vmem:[#allocation7 + $0x78] sm:$0xff]
    %v174 = vld [vmem:[#allocation7 + $0x80] sm:$0xff]
    %v175 = vld [vmem:[#allocation7 + $0x88] sm:$0xff]
    %v176 = vld [vmem:[#allocation7 + $0x90] sm:$0xff]
    %v177 = vld [vmem:[#allocation7 + $0x98] sm:$0xff]
    %v178 = vld [vmem:[#allocation7 + $0xa0] sm:$0xff]
    %v179 = vld [vmem:[#allocation7 + $0xa8] sm:$0xff]
    %v180 = vld [vmem:[#allocation7 + $0xb0] sm:$0xff]
    %v181 = vld [vmem:[#allocation7 + $0xb8] sm:$0xff]
    %v182 = vld [vmem:[#allocation7 + $0xc0] sm:$0xff]
    %v183 = vld [vmem:[#allocation7 + $0xc8] sm:$0xff]
    %v184 = vld [vmem:[#allocation7 + $0xd0] sm:$0xff]
    %v185 = vld [vmem:[#allocation7 + $0xd8] sm:$0xff]
    %v186 = vld [vmem:[#allocation7 + $0xe0] sm:$0xff]
    %v187 = vld [vmem:[#allocation7 + $0xe8] sm:$0xff]
    %v188 = vld [vmem:[#allocation7 + $0xf0] sm:$0xff]
    %v189 = vld [vmem:[#allocation7 + $0xf8] sm:$0xff]
    %v190 = vld [vmem:[%s4] sm:$0x1]
    %v192 = vlaneseq
    %v193 = vshrl.u32 %v192, 7
    %v194 = vsub.s32 0, %v193
    %v195 = vrot.slane %v190, %v194
    %197 = vmatprep.subr.mxu0 0.0
    %198 = vmatpush1.msra.mxu0 %v158
    %199 = vmatprep.subr.mxu0 0.0
    %200 = vmatpush1.msra.mxu0 %v159
    %201 = vmatprep.subr.mxu0 0.0
    %202 = vmatpush1.msra.mxu0 %v160
    %203 = vmatprep.subr.mxu0 0.0
    %204 = vmatpush1.msra.mxu0 %v161
    %205 = vmatprep.subr.mxu0 0.0
    %206 = vmatpush1.msra.mxu0 %v162
    %207 = vmatprep.subr.mxu0 0.0
    %208 = vmatpush1.msra.mxu0 %v163
    %209 = vmatprep.subr.mxu0 0.0
    %210 = vmatpush1.msra.mxu0 %v164
    %211 = vmatprep.subr.mxu0 0.0
    %212 = vmatpush1.msra.mxu0 %v165
    %213 = vmatprep.subr.mxu0 0.0
    %214 = vmatpush1.msra.mxu0 %v166
    %215 = vmatprep.subr.mxu0 0.0
    %216 = vmatpush1.msra.mxu0 %v167
    %217 = vmatprep.subr.mxu0 0.0
    %218 = vmatpush1.msra.mxu0 %v168
    %219 = vmatprep.subr.mxu0 0.0
    %220 = vmatpush1.msra.mxu0 %v169
    %221 = vmatprep.subr.mxu0 0.0
    %222 = vmatpush1.msra.mxu0 %v170
    %223 = vmatprep.subr.mxu0 0.0
    %224 = vmatpush1.msra.mxu0 %v171
    %225 = vmatprep.subr.mxu0 0.0
    %226 = vmatpush1.msra.mxu0 %v172
    %227 = vmatprep.subr.mxu0 0.0
    %228 = vmatpush1.msra.mxu0 %v173
    %229 = vmatprep.subr.mxu0 0.0
    %230 = vmatpush1.msra.mxu0 %v174
    %231 = vmatprep.subr.mxu0 0.0
    %232 = vmatpush1.msra.mxu0 %v175
    %233 = vmatprep.subr.mxu0 0.0
    %234 = vmatpush1.msra.mxu0 %v176
    %235 = vmatprep.subr.mxu0 0.0
    %236 = vmatpush1.msra.mxu0 %v177
    %237 = vmatprep.subr.mxu0 0.0
    %238 = vmatpush1.msra.mxu0 %v178
    %239 = vmatprep.subr.mxu0 0.0
    %240 = vmatpush1.msra.mxu0 %v179
    %241 = vmatprep.subr.mxu0 0.0
    %242 = vmatpush1.msra.mxu0 %v180
    %243 = vmatprep.subr.mxu0 0.0
    %244 = vmatpush1.msra.mxu0 %v181
    %245 = vmatprep.subr.mxu0 0.0
    %246 = vmatpush1.msra.mxu0 %v182
    %247 = vmatprep.subr.mxu0 0.0
    %248 = vmatpush1.msra.mxu0 %v183
    %249 = vmatprep.subr.mxu0 0.0
    %250 = vmatpush1.msra.mxu0 %v184
    %251 = vmatprep.subr.mxu0 0.0
    %252 = vmatpush1.msra.mxu0 %v185
    %253 = vmatprep.subr.mxu0 0.0
    %254 = vmatpush1.msra.mxu0 %v186
    %255 = vmatprep.subr.mxu0 0.0
    %256 = vmatpush1.msra.mxu0 %v187
    %257 = vmatprep.subr.mxu0 0.0
    %258 = vmatpush1.msra.mxu0 %v188
    %259 = vmatprep.subr.mxu0 0.0
    %260 = vmatpush1.msra.mxu0 %v189
    %261 = vmatprep.mubr.f32.mxu0 %v157
    %262 = vmatmul.mubr.f32.gmra.mrb[0].mxu0 %v156
    %v263 = vpop.f32.mrb[0].mxu0
    %v264 = vadd.f32 %v195, %v263
    %v265 = vpop.f32.mrb[0].mxu0
    %266 = vdwg.mxu0
    %267 = vst [vmem:[#allocation8] sm:$0xff] %v264
    // Predicated region
    $region34: #{tpu_custom_call.1} parent=1 // pred_check
      _
    $region35: #{tpu_custom_call.1} parent=1 // pred_check_branch
      %269 = sbr.rel (0) target = $region37
    $region36: #{tpu_custom_call.1} parent=1 // pred_region
      %s271 = ssub.s32 128, 128
      %272 = vsyncadd [#allocation4], %s271
      %s274 = sshll.u32 [#allocation8], 4
      %s275 = int_to_ptr.vmem [resolvable:$true] %s274
      %277 = dma.vmem_to_hbm [thread:$0]  %s275, 128, %s5, [#allocation4]
    $region37: #{tpu_custom_call.1} parent=1 // pred_fallthru
      _
    // Predicated region
    $region38: #{tpu_custom_call.1} parent=1 // pred_check
      _
    $region39: #{tpu_custom_call.1} parent=1 // pred_check_branch
      %279 = sbr.rel (0) target = $region41
    $region40: #{tpu_custom_call.1} parent=1 // pred_region
      %280 = dma.done [#allocation4], 128
    $region41: #{tpu_custom_call.1} parent=1 // pred_fallthru
      _
    %281 = vsyncpa [#allocation3], 1
    %282 = vsyncpa [#allocation6], 1
    %283 = vsyncpa [#allocation4], 1

</llo_original>
